<compile_context>
chip_gen: v5e
topology: v5e:2x2
jax: 0.10.0
libtpu: 0.0.40
codegen_flags: <defaults>
</compile_context>

<pallas_src>
import jax
import jax.numpy as jnp
from jax.experimental import pallas as pl
from jax.experimental.pallas import tpu as pltpu

_MIB = 1 << 20

# Explicit scoped-VMEM limit: peak BlockSpec use is 3 input + 2 output buffers
# of at most one tile-budget each (<= 20 MiB), so 28 MiB leaves slack and is
# safe on every generation (v5e/v6e: 128 MiB physical, v7x: 64 MiB physical).
_VMEM_LIMIT_BYTES = 28 * _MIB


def _squeezed():
    # Size-1 block dim removed from the kernel view; `None` is the classic
    # spelling, pl.Squeezed() the explicit one in newer JAX.
    return pl.Squeezed() if hasattr(pl, "Squeezed") else None


def _buffered(n):
    # Deeper pipelining for the strided input DMA (default is 2 buffers).
    if hasattr(pl, "Buffered"):
        return {"pipeline_mode": pl.Buffered(n)}
    return {}


def _tile_budget_bytes() -> int:
    """Per-tile VMEM budget, gated per TPU generation.

    v6e/v7x: 4 MiB tiles keep the ~0.35 us per-grid-step overhead under ~10%
    of the step at 1.4-3.2 TB/s HBM; peak use (3 in + 2 out buffers ~ 20 MiB)
    fits the explicit 28 MiB scoped limit and v7x's 64 MiB physical VMEM.
    v5e (~0.8 TB/s) gains little beyond 2 MiB, so keep the smaller footprint.
    """
    kind = ""
    try:
        kind = jax.devices()[0].device_kind.lower()
    except Exception:  # defensive: the 4 MiB default is safe everywhere
        pass
    return 2 * _MIB if "v5" in kind else 4 * _MIB


def _copy_kernel(x_ref, o_ref):
    # Squeezed path body: both refs are (td0, tc) VMEM tiles; the permutation
    # is carried entirely by the BlockSpec index maps (DMA addressing).
    o_ref[...] = x_ref[...]


def _permute_grouped(x: jax.Array, td1: int) -> jax.Array:
    """Grouped-d1 path: one grid step copies td1 whole (d0, d2) planes."""
    d0, d1, d2 = x.shape
    n_steps = pl.cdiv(d1, td1)
    buf_kwargs = _buffered(3) if n_steps > 2 else {}

    def kernel(x_ref, o_ref):
        # x_ref: (d0, td1, d2); o_ref: (td1, d0 * d2) lane-dense slab.
        # Only leading-index loads and 128-aligned static lane-slice stores.
        for i in range(d0):
            o_ref[:, pl.ds(i * d2, d2)] = x_ref[i]

    slab = pl.pallas_call(
        kernel,
        out_shape=jax.ShapeDtypeStruct((d1, d0 * d2), x.dtype),
        grid_spec=pltpu.PrefetchScalarGridSpec(
            num_scalar_prefetch=0,
            grid=(n_steps,),
            in_specs=[
                pl.BlockSpec((d0, td1, d2), lambda j: (0, j, 0), **buf_kwargs)
            ],
            out_specs=pl.BlockSpec((td1, d0 * d2), lambda j: (j, 0)),
        ),
        compiler_params=pltpu.CompilerParams(
            dimension_semantics=("parallel",),
            vmem_limit_bytes=_VMEM_LIMIT_BYTES,
        ),
    )(x)
    # slab[j, i*d2:(i+1)*d2] == x[i, j, :], so this reshape is a free,
    # contiguous view of the already-permuted data.
    return slab.reshape(d1, d0, d2)


def _permute_squeezed(x: jax.Array, budget: int, sub: int) -> jax.Array:
    """General path: permutation expressed purely via BlockSpec index maps."""
    d0, d1, d2 = x.shape
    itemsize = x.dtype.itemsize

    # Lane (last-dim) tile.  Blocks stay within the budget even when the dim
    # has no clean divisor: a 128-multiple block with a ragged trailing block
    # is legal (pl.cdiv grid + Pallas masking), so we never fall back to a
    # full, budget-blowing dimension.
    max_tc = max(128, (budget // (sub * itemsize)) // 128 * 128)
    if d2 % 128 == 0:
        tc = min(d2, max_tc)
    elif d2 * sub * itemsize <= budget:
        tc = d2  # full extent: always legal, needed for non-128-multiple d2
    else:
        tc = max_tc  # 128-multiple cap; trailing lane block is ragged/masked

    # Sublane tile along d0 (the output block's second-to-minor dim): full d0
    # if it fits, otherwise the largest multiple of `sub` within the budget.
    max_td0 = max(sub, (budget // (tc * itemsize)) // sub * sub)
    td0 = d0 if d0 <= max_td0 else max_td0

    n_i = pl.cdiv(d0, td0)
    n_c = pl.cdiv(d2, tc)
    sq = _squeezed()
    n_steps = d1 * n_i * n_c
    buf_kwargs = _buffered(3) if n_steps > 2 else {}

    # Input  (d0, d1, d2): block (td0, 1, tc) -> strided reads.
    # Output (d1, d0, d2): block (1, td0, tc) -> contiguous, lane-dense writes.
    # Lead with the larger of (d1, #d0-tiles) so the v7x megacore split gets
    # balanced work; keep the d2 sweep innermost for sequential HBM writeback.
    if d1 >= n_i:
        grid = (d1, n_i, n_c)
        in_spec = pl.BlockSpec(
            (td0, sq, tc), lambda j, i, c: (i, j, c), **buf_kwargs
        )
        out_spec = pl.BlockSpec((sq, td0, tc), lambda j, i, c: (j, i, c))
    else:
        grid = (n_i, d1, n_c)
        in_spec = pl.BlockSpec(
            (td0, sq, tc), lambda i, j, c: (i, j, c), **buf_kwargs
        )
        out_spec = pl.BlockSpec((sq, td0, tc), lambda i, j, c: (j, i, c))

    return pl.pallas_call(
        _copy_kernel,
        out_shape=jax.ShapeDtypeStruct((d1, d0, d2), x.dtype),
        grid_spec=pltpu.PrefetchScalarGridSpec(
            num_scalar_prefetch=0,
            grid=grid,
            in_specs=[in_spec],
            out_specs=out_spec,
        ),
        compiler_params=pltpu.CompilerParams(
            dimension_semantics=("parallel",) * len(grid),
            vmem_limit_bytes=_VMEM_LIMIT_BYTES,
        ),
    )(x)


def permute_102(x: jax.Array) -> jax.Array:
    """Pallas equivalent of torch.permute(x, (1, 0, 2)) for a 3-D array."""
    assert x.ndim == 3, "Permute module expects a 3-D input"
    d0, d1, d2 = x.shape
    if d0 == 0 or d1 == 0 or d2 == 0:
        return jnp.zeros((d1, d0, d2), x.dtype)

    itemsize = x.dtype.itemsize
    # Sublane packing of the second-to-minor tile dim: 8 rows (32-bit),
    # 16 rows (16-bit), 32 rows (8-bit) per vreg.
    sub = {1: 32, 2: 16}.get(itemsize, 8)
    budget = _tile_budget_bytes()

    # Grouped-d1 path for small, 128-aligned (d0, d2) planes: avoids the d1x
    # grid-step overhead and the tiny strided DMA bursts of the squeezed path,
    # and writes a lane-dense output slab.
    plane_bytes = d0 * d2 * itemsize
    if d2 % 128 == 0 and 0 < d0 <= 256 and plane_bytes <= _MIB:
        max_td1 = budget // plane_bytes
        if d1 <= max_td1:
            return _permute_grouped(x, d1)
        if max_td1 >= sub:
            return _permute_grouped(x, (max_td1 // sub) * sub)

    return _permute_squeezed(x, budget, sub)


if __name__ == "__main__":
    key = jax.random.PRNGKey(0)

    def _check(x):
        out = jax.block_until_ready(permute_102(x))
        ref = jnp.transpose(x, (1, 0, 2))
        assert out.shape == ref.shape, (out.shape, ref.shape)
        assert out.dtype == x.dtype
        assert bool(jnp.array_equal(out, ref)), f"mismatch for shape {x.shape}"

    k1, k2, k3, k4 = jax.random.split(key, 4)

    # Grouped path: small 128-aligned (d0, d2) plane, f32.
    _check(jax.random.normal(k1, (16, 8, 256), dtype=jnp.float32))
    # Squeezed path: non-128-multiple d2, bf16 (16-row sublane packing),
    # exercises Buffered(3) on the strided input.
    _check(jax.random.normal(k2, (32, 6, 96), dtype=jnp.bfloat16))
    # Squeezed path: 128-aligned d2 but d0 too large for the grouped unroll.
    _check(jax.random.normal(k3, (272, 2, 128), dtype=jnp.float32))
    # Grouped path with odd (non-multiple-of-8) d0 / d1 extents.
    _check(jax.random.normal(k4, (10, 5, 128), dtype=jnp.float32))

    print("KERNEL_OK")
</pallas_src>

<mosaic_0001>
module attributes {stable_mosaic.version = 11 : i64} {
  func.func @kernel(%arg0: i32, %arg1: memref<16x8x256xf32, #tpu.memory_space<vmem>>, %arg2: memref<8x4096xf32, #tpu.memory_space<vmem>>) attributes {dimension_semantics = [#tpu.dimension_semantics<parallel>], iteration_bounds = array<i64: 1>, scalar_prefetch = 0 : i64, scratch_operands = 0 : i64, tpu.core_type = #tpu.core_type<tc>, window_params = [{transform_indices = @transform_0, window_bounds = array<i64: 16, 8, 256>}, {transform_indices = @transform_1, window_bounds = array<i64: 8, 4096>}]} {
    %c0 = arith.constant 0 : index
    %c0_0 = arith.constant 0 : index
    %c0_1 = arith.constant 0 : index
    %0 = vector.load %arg1[%c0, %c0_0, %c0_1] : memref<16x8x256xf32, #tpu.memory_space<vmem>>, vector<1x8x256xf32>
    %1 = vector.shape_cast %0 : vector<1x8x256xf32> to vector<8x256xf32>
    %c0_2 = arith.constant 0 : index
    %c0_3 = arith.constant 0 : index
    %2 = vector.load %arg2[%c0_2, %c0_3] : memref<8x4096xf32, #tpu.memory_space<vmem>>, vector<8x256xf32>
    tpu.vector_store %arg2[%c0_2, %c0_3], %1 {strides = array<i32>} : memref<8x4096xf32, #tpu.memory_space<vmem>>, vector<8x256xf32>,
    %c1 = arith.constant 1 : index
    %c0_4 = arith.constant 0 : index
    %c0_5 = arith.constant 0 : index
    %3 = vector.load %arg1[%c1, %c0_4, %c0_5] : memref<16x8x256xf32, #tpu.memory_space<vmem>>, vector<1x8x256xf32>
    %4 = vector.shape_cast %3 : vector<1x8x256xf32> to vector<8x256xf32>
    %c0_6 = arith.constant 0 : index
    %c256 = arith.constant 256 : index
    %5 = vector.load %arg2[%c0_6, %c256] : memref<8x4096xf32, #tpu.memory_space<vmem>>, vector<8x256xf32>
    tpu.vector_store %arg2[%c0_6, %c256], %4 {strides = array<i32>} : memref<8x4096xf32, #tpu.memory_space<vmem>>, vector<8x256xf32>,
    %c2 = arith.constant 2 : index
    %c0_7 = arith.constant 0 : index
    %c0_8 = arith.constant 0 : index
    %6 = vector.load %arg1[%c2, %c0_7, %c0_8] : memref<16x8x256xf32, #tpu.memory_space<vmem>>, vector<1x8x256xf32>
    %7 = vector.shape_cast %6 : vector<1x8x256xf32> to vector<8x256xf32>
    %c0_9 = arith.constant 0 : index
    %c512 = arith.constant 512 : index
    %8 = vector.load %arg2[%c0_9, %c512] : memref<8x4096xf32, #tpu.memory_space<vmem>>, vector<8x256xf32>
    tpu.vector_store %arg2[%c0_9, %c512], %7 {strides = array<i32>} : memref<8x4096xf32, #tpu.memory_space<vmem>>, vector<8x256xf32>,
    %c3 = arith.constant 3 : index
    %c0_10 = arith.constant 0 : index
    %c0_11 = arith.constant 0 : index
    %9 = vector.load %arg1[%c3, %c0_10, %c0_11] : memref<16x8x256xf32, #tpu.memory_space<vmem>>, vector<1x8x256xf32>
    %10 = vector.shape_cast %9 : vector<1x8x256xf32> to vector<8x256xf32>
    %c0_12 = arith.constant 0 : index
    %c768 = arith.constant 768 : index
    %11 = vector.load %arg2[%c0_12, %c768] : memref<8x4096xf32, #tpu.memory_space<vmem>>, vector<8x256xf32>
    tpu.vector_store %arg2[%c0_12, %c768], %10 {strides = array<i32>} : memref<8x4096xf32, #tpu.memory_space<vmem>>, vector<8x256xf32>,
    %c4 = arith.constant 4 : index
    %c0_13 = arith.constant 0 : index
    %c0_14 = arith.constant 0 : index
    %12 = vector.load %arg1[%c4, %c0_13, %c0_14] : memref<16x8x256xf32, #tpu.memory_space<vmem>>, vector<1x8x256xf32>
    %13 = vector.shape_cast %12 : vector<1x8x256xf32> to vector<8x256xf32>
    %c0_15 = arith.constant 0 : index
    %c1024 = arith.constant 1024 : index
    %14 = vector.load %arg2[%c0_15, %c1024] : memref<8x4096xf32, #tpu.memory_space<vmem>>, vector<8x256xf32>
    tpu.vector_store %arg2[%c0_15, %c1024], %13 {strides = array<i32>} : memref<8x4096xf32, #tpu.memory_space<vmem>>, vector<8x256xf32>,
    %c5 = arith.constant 5 : index
    %c0_16 = arith.constant 0 : index
    %c0_17 = arith.constant 0 : index
    %15 = vector.load %arg1[%c5, %c0_16, %c0_17] : memref<16x8x256xf32, #tpu.memory_space<vmem>>, vector<1x8x256xf32>
    %16 = vector.shape_cast %15 : vector<1x8x256xf32> to vector<8x256xf32>
    %c0_18 = arith.constant 0 : index
    %c1280 = arith.constant 1280 : index
    %17 = vector.load %arg2[%c0_18, %c1280] : memref<8x4096xf32, #tpu.memory_space<vmem>>, vector<8x256xf32>
    tpu.vector_store %arg2[%c0_18, %c1280], %16 {strides = array<i32>} : memref<8x4096xf32, #tpu.memory_space<vmem>>, vector<8x256xf32>,
    %c6 = arith.constant 6 : index
    %c0_19 = arith.constant 0 : index
    %c0_20 = arith.constant 0 : index
    %18 = vector.load %arg1[%c6, %c0_19, %c0_20] : memref<16x8x256xf32, #tpu.memory_space<vmem>>, vector<1x8x256xf32>
    %19 = vector.shape_cast %18 : vector<1x8x256xf32> to vector<8x256xf32>
    %c0_21 = arith.constant 0 : index
    %c1536 = arith.constant 1536 : index
    %20 = vector.load %arg2[%c0_21, %c1536] : memref<8x4096xf32, #tpu.memory_space<vmem>>, vector<8x256xf32>
    tpu.vector_store %arg2[%c0_21, %c1536], %19 {strides = array<i32>} : memref<8x4096xf32, #tpu.memory_space<vmem>>, vector<8x256xf32>,
    %c7 = arith.constant 7 : index
    %c0_22 = arith.constant 0 : index
    %c0_23 = arith.constant 0 : index
    %21 = vector.load %arg1[%c7, %c0_22, %c0_23] : memref<16x8x256xf32, #tpu.memory_space<vmem>>, vector<1x8x256xf32>
    %22 = vector.shape_cast %21 : vector<1x8x256xf32> to vector<8x256xf32>
    %c0_24 = arith.constant 0 : index
    %c1792 = arith.constant 1792 : index
    %23 = vector.load %arg2[%c0_24, %c1792] : memref<8x4096xf32, #tpu.memory_space<vmem>>, vector<8x256xf32>
    tpu.vector_store %arg2[%c0_24, %c1792], %22 {strides = array<i32>} : memref<8x4096xf32, #tpu.memory_space<vmem>>, vector<8x256xf32>,
    %c8 = arith.constant 8 : index
    %c0_25 = arith.constant 0 : index
    %c0_26 = arith.constant 0 : index
    %24 = vector.load %arg1[%c8, %c0_25, %c0_26] : memref<16x8x256xf32, #tpu.memory_space<vmem>>, vector<1x8x256xf32>
    %25 = vector.shape_cast %24 : vector<1x8x256xf32> to vector<8x256xf32>
    %c0_27 = arith.constant 0 : index
    %c2048 = arith.constant 2048 : index
    %26 = vector.load %arg2[%c0_27, %c2048] : memref<8x4096xf32, #tpu.memory_space<vmem>>, vector<8x256xf32>
    tpu.vector_store %arg2[%c0_27, %c2048], %25 {strides = array<i32>} : memref<8x4096xf32, #tpu.memory_space<vmem>>, vector<8x256xf32>,
    %c9 = arith.constant 9 : index
    %c0_28 = arith.constant 0 : index
    %c0_29 = arith.constant 0 : index
    %27 = vector.load %arg1[%c9, %c0_28, %c0_29] : memref<16x8x256xf32, #tpu.memory_space<vmem>>, vector<1x8x256xf32>
    %28 = vector.shape_cast %27 : vector<1x8x256xf32> to vector<8x256xf32>
    %c0_30 = arith.constant 0 : index
    %c2304 = arith.constant 2304 : index
    %29 = vector.load %arg2[%c0_30, %c2304] : memref<8x4096xf32, #tpu.memory_space<vmem>>, vector<8x256xf32>
    tpu.vector_store %arg2[%c0_30, %c2304], %28 {strides = array<i32>} : memref<8x4096xf32, #tpu.memory_space<vmem>>, vector<8x256xf32>,
    %c10 = arith.constant 10 : index
    %c0_31 = arith.constant 0 : index
    %c0_32 = arith.constant 0 : index
    %30 = vector.load %arg1[%c10, %c0_31, %c0_32] : memref<16x8x256xf32, #tpu.memory_space<vmem>>, vector<1x8x256xf32>
    %31 = vector.shape_cast %30 : vector<1x8x256xf32> to vector<8x256xf32>
    %c0_33 = arith.constant 0 : index
    %c2560 = arith.constant 2560 : index
    %32 = vector.load %arg2[%c0_33, %c2560] : memref<8x4096xf32, #tpu.memory_space<vmem>>, vector<8x256xf32>
    tpu.vector_store %arg2[%c0_33, %c2560], %31 {strides = array<i32>} : memref<8x4096xf32, #tpu.memory_space<vmem>>, vector<8x256xf32>,
    %c11 = arith.constant 11 : index
    %c0_34 = arith.constant 0 : index
    %c0_35 = arith.constant 0 : index
    %33 = vector.load %arg1[%c11, %c0_34, %c0_35] : memref<16x8x256xf32, #tpu.memory_space<vmem>>, vector<1x8x256xf32>
    %34 = vector.shape_cast %33 : vector<1x8x256xf32> to vector<8x256xf32>
    %c0_36 = arith.constant 0 : index
    %c2816 = arith.constant 2816 : index
    %35 = vector.load %arg2[%c0_36, %c2816] : memref<8x4096xf32, #tpu.memory_space<vmem>>, vector<8x256xf32>
    tpu.vector_store %arg2[%c0_36, %c2816], %34 {strides = array<i32>} : memref<8x4096xf32, #tpu.memory_space<vmem>>, vector<8x256xf32>,
    %c12 = arith.constant 12 : index
    %c0_37 = arith.constant 0 : index
    %c0_38 = arith.constant 0 : index
    %36 = vector.load %arg1[%c12, %c0_37, %c0_38] : memref<16x8x256xf32, #tpu.memory_space<vmem>>, vector<1x8x256xf32>
    %37 = vector.shape_cast %36 : vector<1x8x256xf32> to vector<8x256xf32>
    %c0_39 = arith.constant 0 : index
    %c3072 = arith.constant 3072 : index
    %38 = vector.load %arg2[%c0_39, %c3072] : memref<8x4096xf32, #tpu.memory_space<vmem>>, vector<8x256xf32>
    tpu.vector_store %arg2[%c0_39, %c3072], %37 {strides = array<i32>} : memref<8x4096xf32, #tpu.memory_space<vmem>>, vector<8x256xf32>,
    %c13 = arith.constant 13 : index
    %c0_40 = arith.constant 0 : index
    %c0_41 = arith.constant 0 : index
    %39 = vector.load %arg1[%c13, %c0_40, %c0_41] : memref<16x8x256xf32, #tpu.memory_space<vmem>>, vector<1x8x256xf32>
    %40 = vector.shape_cast %39 : vector<1x8x256xf32> to vector<8x256xf32>
    %c0_42 = arith.constant 0 : index
    %c3328 = arith.constant 3328 : index
    %41 = vector.load %arg2[%c0_42, %c3328] : memref<8x4096xf32, #tpu.memory_space<vmem>>, vector<8x256xf32>
    tpu.vector_store %arg2[%c0_42, %c3328], %40 {strides = array<i32>} : memref<8x4096xf32, #tpu.memory_space<vmem>>, vector<8x256xf32>,
    %c14 = arith.constant 14 : index
    %c0_43 = arith.constant 0 : index
    %c0_44 = arith.constant 0 : index
    %42 = vector.load %arg1[%c14, %c0_43, %c0_44] : memref<16x8x256xf32, #tpu.memory_space<vmem>>, vector<1x8x256xf32>
    %43 = vector.shape_cast %42 : vector<1x8x256xf32> to vector<8x256xf32>
    %c0_45 = arith.constant 0 : index
    %c3584 = arith.constant 3584 : index
    %44 = vector.load %arg2[%c0_45, %c3584] : memref<8x4096xf32, #tpu.memory_space<vmem>>, vector<8x256xf32>
    tpu.vector_store %arg2[%c0_45, %c3584], %43 {strides = array<i32>} : memref<8x4096xf32, #tpu.memory_space<vmem>>, vector<8x256xf32>,
    %c15 = arith.constant 15 : index
    %c0_46 = arith.constant 0 : index
    %c0_47 = arith.constant 0 : index
    %45 = vector.load %arg1[%c15, %c0_46, %c0_47] : memref<16x8x256xf32, #tpu.memory_space<vmem>>, vector<1x8x256xf32>
    %46 = vector.shape_cast %45 : vector<1x8x256xf32> to vector<8x256xf32>
    %c0_48 = arith.constant 0 : index
    %c3840 = arith.constant 3840 : index
    %47 = vector.load %arg2[%c0_48, %c3840] : memref<8x4096xf32, #tpu.memory_space<vmem>>, vector<8x256xf32>
    tpu.vector_store %arg2[%c0_48, %c3840], %46 {strides = array<i32>} : memref<8x4096xf32, #tpu.memory_space<vmem>>, vector<8x256xf32>,
    return
  }
  func.func @transform_0(%arg0: i32) -> (i32, i32, i32) {
    %c0_i32 = arith.constant 0 : i32
    %c0_i32_0 = arith.constant 0 : i32
    %c0_i32_1 = arith.constant 0 : i32
    return %c0_i32, %arg0, %c0_i32_0 : i32, i32, i32
  }
  func.func @transform_1(%arg0: i32) -> (i32, i32) {
    %c0_i32 = arith.constant 0 : i32
    %c0_i32_0 = arith.constant 0 : i32
    return %arg0, %c0_i32 : i32, i32
  }
}

</mosaic_0001>

<llo_original>
// kernel: tpu_custom_call.1
$region0: #{tpu_custom_call.1}
  #allocation0 [shape = 'u32[]', space=smem, size = 0x4, offset = 0x4, fixed_abs, tag = 'smem constant byte address 0x4 - core index']
  #allocation1 [shape = 'u32[72,128]{1,0:T(1,128)}', space=vmem, size = 0x9000, scoped, tag = 'internal scratch']
  %s0 = inlined_call_operand.hbm [shape: f32[16,8,256], index: 0, kind: input, shape index: {}]
  %s1 = inlined_call_operand.hbm [shape: f32[8,4096], index: 1, kind: output, shape index: {}]
  %s2 = sld [smem:[#allocation0]]
  $region18: #{tpu_custom_call.1} parent=0
    _
  %s4 = ssub.s32 1, %s2
  %s5 = scalar_select 0, %s4, %s2
  $region1: #{tpu_custom_call.1} parent=0
    #allocation2 [shape = 'u8[131072]{0}', space=vmem, size = 0x20000, scoped, tag = 'input window, operand 0, single buffered']
    #allocation3 [shape = 's32[1]{0}', space=sflag, size = 0x4, scoped, tag = 'scoped memory for tpu_custom_call.1']
    #allocation4 [shape = 's32[1]{0}', space=sflag, size = 0x4, scoped, tag = 'scoped memory for tpu_custom_call.1']
    #allocation5 [shape = 'u8[131072]{0}', space=vmem, size = 0x20000, scoped, tag = 'output window, operand 0, single buffered']
    %6 = vsyncpa [#allocation3], 0
    %7 = vsyncpa [#allocation4], 0
    // Predicated region
    $region2: #{tpu_custom_call.1} parent=1 // pred_check
      _
    $region3: #{tpu_custom_call.1} parent=1 // pred_check_branch
      %9 = sbr.rel (0) target = $region5
    $region4: #{tpu_custom_call.1} parent=1 // pred_region
      %11 = vsyncadd [#allocation3], 0
      %s12 = sshll.u32 %s0, 4
      %s13 = int_to_ptr.hbm [resolvable:$true] %s12
      %s14 = sshll.u32 [#allocation2], 4
      %s15 = int_to_ptr.vmem [resolvable:$true] %s14
      %20 = dma.hbm_to_vmem [thread:$0]  %s13, 4096, %s15, [#allocation3], 256, 256, 16
    $region5: #{tpu_custom_call.1} parent=1 // pred_fallthru
      _
    // Predicated region
    $region6: #{tpu_custom_call.1} parent=1 // pred_check
      _
    $region7: #{tpu_custom_call.1} parent=1 // pred_check_branch
      %22 = sbr.rel (0) target = $region9
    $region8: #{tpu_custom_call.1} parent=1 // pred_region
      %24 = dma.done [#allocation3], 4096
    $region9: #{tpu_custom_call.1} parent=1 // pred_fallthru
      _
    %v25 = vld [vmem:[#allocation2] sm:$0xff]
    %v26 = vld [vmem:[#allocation2 + $0x8] sm:$0xff]
    %27 = vst [vmem:[#allocation5] sm:$0xff] %v25
    %28 = vst [vmem:[#allocation5 + $0x8] sm:$0xff] %v26
    %s29 = scalar_lea.vmem [#allocation2], 16
    %v30 = vld [vmem:[%s29] sm:$0xff]
    %v31 = vld [vmem:[%s29 + $0x8] sm:$0xff]
    %32 = vst [vmem:[#allocation5 + $0x10] sm:$0xff] %v30
    %33 = vst [vmem:[#allocation5 + $0x18] sm:$0xff] %v31
    %s34 = scalar_lea.vmem [#allocation2], 32
    %v35 = vld [vmem:[%s34] sm:$0xff]
    %v36 = vld [vmem:[%s34 + $0x8] sm:$0xff]
    %37 = vst [vmem:[#allocation5 + $0x20] sm:$0xff] %v35
    %38 = vst [vmem:[#allocation5 + $0x28] sm:$0xff] %v36
    %s39 = scalar_lea.vmem [#allocation2], 48
    %v40 = vld [vmem:[%s39] sm:$0xff]
    %v41 = vld [vmem:[%s39 + $0x8] sm:$0xff]
    %42 = vst [vmem:[#allocation5 + $0x30] sm:$0xff] %v40
    %43 = vst [vmem:[#allocation5 + $0x38] sm:$0xff] %v41
    %s44 = scalar_lea.vmem [#allocation2], 64
    %v45 = vld [vmem:[%s44] sm:$0xff]
    %v46 = vld [vmem:[%s44 + $0x8] sm:$0xff]
    %47 = vst [vmem:[#allocation5 + $0x40] sm:$0xff] %v45
    %48 = vst [vmem:[#allocation5 + $0x48] sm:$0xff] %v46
    %s49 = scalar_lea.vmem [#allocation2], 80
    %v50 = vld [vmem:[%s49] sm:$0xff]
    %v51 = vld [vmem:[%s49 + $0x8] sm:$0xff]
    %52 = vst [vmem:[#allocation5 + $0x50] sm:$0xff] %v50
    %53 = vst [vmem:[#allocation5 + $0x58] sm:$0xff] %v51
    %s54 = scalar_lea.vmem [#allocation2], 96
    %v55 = vld [vmem:[%s54] sm:$0xff]
    %v56 = vld [vmem:[%s54 + $0x8] sm:$0xff]
    %57 = vst [vmem:[#allocation5 + $0x60] sm:$0xff] %v55
    %58 = vst [vmem:[#allocation5 + $0x68] sm:$0xff] %v56
    %s59 = scalar_lea.vmem [#allocation2], 112
    %v60 = vld [vmem:[%s59] sm:$0xff]
    %v61 = vld [vmem:[%s59 + $0x8] sm:$0xff]
    %62 = vst [vmem:[#allocation5 + $0x70] sm:$0xff] %v60
    %63 = vst [vmem:[#allocation5 + $0x78] sm:$0xff] %v61
    %s64 = scalar_lea.vmem [#allocation2], 128
    %v65 = vld [vmem:[%s64] sm:$0xff]
    %v66 = vld [vmem:[%s64 + $0x8] sm:$0xff]
    %67 = vst [vmem:[#allocation5 + $0x80] sm:$0xff] %v65
    %68 = vst [vmem:[#allocation5 + $0x88] sm:$0xff] %v66
    %s69 = scalar_lea.vmem [#allocation2], 144
    %v70 = vld [vmem:[%s69] sm:$0xff]
    %v71 = vld [vmem:[%s69 + $0x8] sm:$0xff]
    %72 = vst [vmem:[#allocation5 + $0x90] sm:$0xff] %v70
    %73 = vst [vmem:[#allocation5 + $0x98] sm:$0xff] %v71
    %s74 = scalar_lea.vmem [#allocation2], 160
    %v75 = vld [vmem:[%s74] sm:$0xff]
    %v76 = vld [vmem:[%s74 + $0x8] sm:$0xff]
    %77 = vst [vmem:[#allocation5 + $0xa0] sm:$0xff] %v75
    %78 = vst [vmem:[#allocation5 + $0xa8] sm:$0xff] %v76
    %s79 = scalar_lea.vmem [#allocation2], 176
    %v80 = vld [vmem:[%s79] sm:$0xff]
    %v81 = vld [vmem:[%s79 + $0x8] sm:$0xff]
    %82 = vst [vmem:[#allocation5 + $0xb0] sm:$0xff] %v80
    %83 = vst [vmem:[#allocation5 + $0xb8] sm:$0xff] %v81
    %s84 = scalar_lea.vmem [#allocation2], 192
    %v85 = vld [vmem:[%s84] sm:$0xff]
    %v86 = vld [vmem:[%s84 + $0x8] sm:$0xff]
    %87 = vst [vmem:[#allocation5 + $0xc0] sm:$0xff] %v85
    %88 = vst [vmem:[#allocation5 + $0xc8] sm:$0xff] %v86
    %s89 = scalar_lea.vmem [#allocation2], 208
    %v90 = vld [vmem:[%s89] sm:$0xff]
    %v91 = vld [vmem:[%s89 + $0x8] sm:$0xff]
    %92 = vst [vmem:[#allocation5 + $0xd0] sm:$0xff] %v90
    %93 = vst [vmem:[#allocation5 + $0xd8] sm:$0xff] %v91
    %s94 = scalar_lea.vmem [#allocation2], 224
    %v95 = vld [vmem:[%s94] sm:$0xff]
    %v96 = vld [vmem:[%s94 + $0x8] sm:$0xff]
    %97 = vst [vmem:[#allocation5 + $0xe0] sm:$0xff] %v95
    %98 = vst [vmem:[#allocation5 + $0xe8] sm:$0xff] %v96
    %s99 = scalar_lea.vmem [#allocation2], 240
    %v100 = vld [vmem:[%s99] sm:$0xff]
    %v101 = vld [vmem:[%s99 + $0x8] sm:$0xff]
    %102 = vst [vmem:[#allocation5 + $0xf0] sm:$0xff] %v100
    %103 = vst [vmem:[#allocation5 + $0xf8] sm:$0xff] %v101
    // Predicated region
    $region10: #{tpu_custom_call.1} parent=1 // pred_check
      _
    $region11: #{tpu_custom_call.1} parent=1 // pred_check_branch
      %105 = sbr.rel (0) target = $region13
    $region12: #{tpu_custom_call.1} parent=1 // pred_region
      %107 = vsyncadd [#allocation4], 0
      %s109 = sshll.u32 [#allocation5], 4
      %s110 = int_to_ptr.vmem [resolvable:$true] %s109
      %s111 = sshll.u32 %s1, 4
      %s112 = int_to_ptr.hbm [resolvable:$true] %s111
      %114 = dma.vmem_to_hbm [thread:$0]  %s110, 4096, %s112, [#allocation4]
    $region13: #{tpu_custom_call.1} parent=1 // pred_fallthru
      _
    // Predicated region
    $region14: #{tpu_custom_call.1} parent=1 // pred_check
      _
    $region15: #{tpu_custom_call.1} parent=1 // pred_check_branch
      %116 = sbr.rel (0) target = $region17
    $region16: #{tpu_custom_call.1} parent=1 // pred_region
      %118 = dma.done [#allocation4], 4096
    $region17: #{tpu_custom_call.1} parent=1 // pred_fallthru
      _
    %119 = vsyncpa [#allocation3], 1
    %120 = vsyncpa [#allocation4], 1

</llo_original>
